<compile_context>
chip_gen: v6e
topology: v6e:2x2x1
jax: 0.10.0
libtpu: 0.0.40
codegen_flags: <defaults>
</compile_context>

<pallas_src>
import functools

import jax
import jax.numpy as jnp
from jax import lax
from jax.experimental import pallas as pl
from jax.experimental.pallas import tpu as pltpu


def _linear_relu_kernel(x_ref, w_ref, b_ref, o_ref, acc_ref):
    """One (tm, tn) output tile, accumulated over the K grid axis.

    x_ref:   (tm, tk)  bf16   activation tile
    w_ref:   (tn, tk)  bf16   weight tile in PyTorch (out, in) layout
    b_ref:   (1,  tn)  f32    bias tile
    o_ref:   (tm, tn)  f32    output tile
    acc_ref: (tm, tn)  f32    VMEM accumulator (resident across the K axis)
    """
    k = pl.program_id(2)

    @pl.when(k == 0)
    def _init():
        acc_ref[...] = jnp.zeros_like(acc_ref)

    # Contract x[tm, tk] with w[tn, tk] over the K dim (no HBM transpose).
    acc_ref[...] += lax.dot_general(
        x_ref[...],
        w_ref[...],
        dimension_numbers=(((1,), (1,)), ((), ())),
        preferred_element_type=jnp.float32,
    )

    @pl.when(k == pl.num_programs(2) - 1)
    def _epilogue():
        y = acc_ref[...] + b_ref[...]          # f32 bias add (once per tile)
        o_ref[...] = jnp.maximum(y, 0.0).astype(o_ref.dtype)


def _largest_aligned_divisor(dim, max_tile, align):
    """Largest t <= max_tile with dim % t == 0 and t % align == 0, else dim."""
    best = None
    t = align
    while t <= min(max_tile, dim):
        if dim % t == 0:
            best = t
        t += align
    return best if best is not None else dim


@functools.partial(jax.jit, static_argnames=("use_bf16",))
def layerwise_mlp_block(x, weight, bias, *, use_bf16=True):
    """Equivalent of nn.Linear(H, H) followed by nn.ReLU().

    x:      (B, H_in)     float32
    weight: (H_out, H_in) float32  (PyTorch nn.Linear convention, NOT transposed)
    bias:   (H_out,)      float32
    returns (B, H_out)    float32
    """
    B, H_in = x.shape
    H_out = weight.shape[0]
    out_dtype = x.dtype

    # ---- tile selection (MXU / lane aligned, VMEM-safe on v5e/v6e/v7x) ----
    tm = _largest_aligned_divisor(B, 256, 8)       # sublane-aligned batch tile
    tn = _largest_aligned_divisor(H_out, 512, 128) # lane-dense output tile
    tk = _largest_aligned_divisor(H_in, 512, 128)  # reduction tile

    grid = (B // tm if B % tm == 0 else 1,
            H_out // tn if H_out % tn == 0 else 1,
            H_in // tk if H_in % tk == 0 else 1)

    # ---- dtypes: bf16 operands on the MXU, f32 accumulate / epilogue ----
    mm_dtype = jnp.bfloat16 if use_bf16 else x.dtype
    x_c = x.astype(mm_dtype)
    w_c = weight.astype(mm_dtype)                  # stays (H_out, H_in): no HBM transpose
    b2d = bias.reshape(1, H_out).astype(jnp.float32)

    # ---- VMEM budget (double-buffered tiles + accumulator), explicit limit ----
    bpe = jnp.dtype(mm_dtype).itemsize
    vmem_bytes = 2 * (tm * tk * bpe + tn * tk * bpe + tm * tn * 4 + tn * 4) + tm * tn * 4
    vmem_limit = min(max(int(vmem_bytes * 2) + (1 << 20), 16 * 1024 * 1024),
                     32 * 1024 * 1024)

    cost = pl.CostEstimate(
        flops=2 * B * H_in * H_out,
        transcendentals=0,
        bytes_accessed=bpe * (B * H_in + H_in * H_out) + 4 * (B * H_out + H_out),
    )

    return pl.pallas_call(
        _linear_relu_kernel,
        out_shape=jax.ShapeDtypeStruct((B, H_out), out_dtype),
        grid_spec=pltpu.PrefetchScalarGridSpec(
            num_scalar_prefetch=0,
            grid=grid,
            in_specs=[
                pl.BlockSpec((tm, tk), lambda i, j, k: (i, k)),   # x
                pl.BlockSpec((tn, tk), lambda i, j, k: (j, k)),   # weight (out, in)
                pl.BlockSpec((1, tn), lambda i, j, k: (0, j)),    # bias
            ],
            out_specs=pl.BlockSpec((tm, tn), lambda i, j, k: (i, j)),
            scratch_shapes=[pltpu.VMEM((tm, tn), jnp.float32)],
        ),
        compiler_params=pltpu.CompilerParams(
            dimension_semantics=("parallel", "parallel", "arbitrary"),
            vmem_limit_bytes=vmem_limit,
        ),
        cost_estimate=cost,
    )(x_c, w_c, b2d)


if __name__ == "__main__":
    hidden_layer_dim = 256   # matches the module default
    batch = 8                # NOTE: at B=8 the MXU is mostly idle; batch more
                             # rows per call if possible (free compute).

    key = jax.random.PRNGKey(0)
    kx, kw, kb = jax.random.split(key, 3)

    x = jax.random.normal(kx, (batch, hidden_layer_dim), dtype=jnp.float32)
    # Deterministic synthetic parameters (nn.Linear: weight (out, in), bias (out,))
    bound = 1.0 / (hidden_layer_dim ** 0.5)
    weight = jax.random.uniform(
        kw, (hidden_layer_dim, hidden_layer_dim),
        minval=-bound, maxval=bound, dtype=jnp.float32)
    bias = jax.random.uniform(
        kb, (hidden_layer_dim,),
        minval=-bound, maxval=bound, dtype=jnp.float32)

    out = layerwise_mlp_block(x, weight, bias)
    jax.block_until_ready(out)
    assert out.shape == (batch, hidden_layer_dim)
    assert out.dtype == jnp.float32

    # Reference matching the kernel's bf16-operand / f32-accumulate math.
    xb = x.astype(jnp.bfloat16).astype(jnp.float32)
    wb = weight.astype(jnp.bfloat16).astype(jnp.float32)
    ref_bf16 = jnp.maximum(xb @ wb.T + bias, 0.0)
    assert jnp.allclose(out, ref_bf16, atol=1e-3, rtol=1e-3)

    # Sanity check against the full-f32 PyTorch-equivalent forward (loose tol
    # covers the bf16 operand cast).
    ref_f32 = jnp.maximum(x @ weight.T + bias, 0.0)
    assert jnp.allclose(out, ref_f32, atol=5e-2, rtol=5e-2)

    print("KERNEL_OK")
</pallas_src>

<mosaic_0001>
module attributes {stable_mosaic.version = 11 : i64} {
  func.func @_linear_relu_kernel(%arg0: i32, %arg1: i32, %arg2: i32, %arg3: memref<8x256xbf16, #tpu.memory_space<vmem>>, %arg4: memref<256x256xbf16, #tpu.memory_space<vmem>>, %arg5: memref<1x256xf32, #tpu.memory_space<vmem>>, %arg6: memref<8x256xf32, #tpu.memory_space<vmem>>, %arg7: memref<8x256xf32, #tpu.memory_space<vmem>>) attributes {dimension_semantics = [#tpu.dimension_semantics<parallel>, #tpu.dimension_semantics<parallel>, #tpu.dimension_semantics<arbitrary>], iteration_bounds = array<i64: 1, 1, 1>, scalar_prefetch = 0 : i64, scratch_operands = 1 : i64, tpu.core_type = #tpu.core_type<tc>, window_params = [{transform_indices = @transform_0, window_bounds = array<i64: 8, 256>}, {transform_indices = @transform_1, window_bounds = array<i64: 256, 256>}, {transform_indices = @transform_2, window_bounds = array<i64: 1, 256>}, {transform_indices = @transform_3, window_bounds = array<i64: 8, 256>}]} {
    %c0_i32 = arith.constant 0 : i32
    %0 = arith.cmpi eq, %arg2, %c0_i32 : i32
    %1 = arith.extui %0 : i1 to i32
    %c0_i32_0 = arith.constant 0 : i32
    %2 = arith.cmpi ne, %1, %c0_i32_0 : i32
    scf.if %2 {
      %cst_10 = arith.constant 0.000000e+00 : f32
      %12 = vector.broadcast %cst_10 : f32 to vector<8x256xf32>
      %c0_11 = arith.constant 0 : index
      %c0_12 = arith.constant 0 : index
      %13 = vector.load %arg7[%c0_11, %c0_12] : memref<8x256xf32, #tpu.memory_space<vmem>>, vector<8x256xf32>
      tpu.vector_store %arg7[%c0_11, %c0_12], %12 {strides = array<i32>} : memref<8x256xf32, #tpu.memory_space<vmem>>, vector<8x256xf32>,
    } else {
    }
    %c0 = arith.constant 0 : index
    %c0_1 = arith.constant 0 : index
    %3 = vector.load %arg7[%c0, %c0_1] : memref<8x256xf32, #tpu.memory_space<vmem>>, vector<8x256xf32>
    %c0_2 = arith.constant 0 : index
    %c0_3 = arith.constant 0 : index
    %4 = vector.load %arg3[%c0_2, %c0_3] : memref<8x256xbf16, #tpu.memory_space<vmem>>, vector<8x256xbf16>
    %c0_4 = arith.constant 0 : index
    %c0_5 = arith.constant 0 : index
    %5 = vector.load %arg4[%c0_4, %c0_5] : memref<256x256xbf16, #tpu.memory_space<vmem>>, vector<256x256xbf16>
    %cst = arith.constant dense<0.000000e+00> : vector<8x256xf32>
    %6 = tpu.matmul %4, %5, %cst {dimension_numbers = #tpu.dot_dimension_numbers<[1], [1], [0], [0], [0, 0, 1, 0], [], []>} : vector<8x256xbf16>, vector<256x256xbf16>, vector<8x256xf32> -> vector<8x256xf32>
    %7 = arith.addf %3, %6 : vector<8x256xf32>
    %c0_6 = arith.constant 0 : index
    %c0_7 = arith.constant 0 : index
    %8 = vector.load %arg7[%c0_6, %c0_7] : memref<8x256xf32, #tpu.memory_space<vmem>>, vector<8x256xf32>
    tpu.vector_store %arg7[%c0_6, %c0_7], %7 {strides = array<i32>} : memref<8x256xf32, #tpu.memory_space<vmem>>, vector<8x256xf32>,
    %c0_i32_8 = arith.constant 0 : i32
    %9 = arith.cmpi eq, %arg2, %c0_i32_8 : i32
    %10 = arith.extui %9 : i1 to i32
    %c0_i32_9 = arith.constant 0 : i32
    %11 = arith.cmpi ne, %10, %c0_i32_9 : i32
    scf.if %11 {
      %c0_10 = arith.constant 0 : index
      %c0_11 = arith.constant 0 : index
      %12 = vector.load %arg7[%c0_10, %c0_11] : memref<8x256xf32, #tpu.memory_space<vmem>>, vector<8x256xf32>
      %c0_12 = arith.constant 0 : index
      %c0_13 = arith.constant 0 : index
      %13 = vector.load %arg5[%c0_12, %c0_13] : memref<1x256xf32, #tpu.memory_space<vmem>>, vector<1x256xf32>
      %14 = vector.broadcast %13 : vector<1x256xf32> to vector<8x256xf32>
      %15 = arith.addf %12, %14 : vector<8x256xf32>
      %cst_14 = arith.constant 0.000000e+00 : f32
      %16 = vector.broadcast %cst_14 : f32 to vector<8x256xf32>
      %17 = arith.maximumf %15, %16 : vector<8x256xf32>
      %c0_15 = arith.constant 0 : index
      %c0_16 = arith.constant 0 : index
      %18 = vector.load %arg6[%c0_15, %c0_16] : memref<8x256xf32, #tpu.memory_space<vmem>>, vector<8x256xf32>
      tpu.vector_store %arg6[%c0_15, %c0_16], %17 {strides = array<i32>} : memref<8x256xf32, #tpu.memory_space<vmem>>, vector<8x256xf32>,
    } else {
    }
    return
  }
  func.func @transform_0(%arg0: i32, %arg1: i32, %arg2: i32) -> (i32, i32) {
    %c0_i32 = arith.constant 0 : i32
    return %arg0, %arg2 : i32, i32
  }
  func.func @transform_1(%arg0: i32, %arg1: i32, %arg2: i32) -> (i32, i32) {
    %c0_i32 = arith.constant 0 : i32
    return %arg1, %arg2 : i32, i32
  }
  func.func @transform_2(%arg0: i32, %arg1: i32, %arg2: i32) -> (i32, i32) {
    %c0_i32 = arith.constant 0 : i32
    %c0_i32_0 = arith.constant 0 : i32
    return %c0_i32, %arg1 : i32, i32
  }
  func.func @transform_3(%arg0: i32, %arg1: i32, %arg2: i32) -> (i32, i32) {
    %c0_i32 = arith.constant 0 : i32
    return %arg0, %arg1 : i32, i32
  }
}

</mosaic_0001>

<llo_original>
// kernel: layerwise_mlp_block.1
$region0: #{layerwise_mlp_block.1}
  #allocation0 [shape = 'u32[]', space=smem, size = 0x4, offset = 0x4, fixed_abs, tag = 'smem constant byte address 0x4 - core index']
  #allocation1 [shape = 'u32[144,128]{1,0:T(1,128)}', space=vmem, size = 0x12000, scoped, tag = 'internal scratch']
  #allocation2 [shape = 'f32[8,256]{1,0:T(8,128)}', space=vmem, size = 0x2000, scoped, tag = 'scratch operand']
  %s0 = inlined_call_operand.vmem [shape: bf16[8,256], index: 0, kind: input, shape index: {}]
  %s1 = inlined_call_operand.vmem [shape: bf16[256,256], index: 1, kind: input, shape index: {}]
  %s2 = inlined_call_operand.vmem [shape: f32[1,256], index: 2, kind: input, shape index: {}]
  %s3 = inlined_call_operand.hbm [shape: f32[8,256], index: 3, kind: output, shape index: {}]
  %s4 = sld [smem:[#allocation0]]
  $region30: #{layerwise_mlp_block.1} parent=0
    _
  %s6 = ssub.s32 1, %s4
  %s7 = scalar_select 0, %s6, %s4
  $region1: #{layerwise_mlp_block.1} parent=0
    #allocation3 [shape = 'u8[8192]{0}', space=vmem, size = 0x2000, scoped, tag = 'output window, operand 0, single buffered']
    #allocation4 [shape = 's32[1]{0}', space=sflag, size = 0x4, scoped, tag = 'scoped memory for layerwise_mlp_block.1']
    %8 = vsyncpa [#allocation4], 0
    // Predicated region
    $region2: #{layerwise_mlp_block.1} parent=1 // pred_check
      _
    $region3: #{layerwise_mlp_block.1} parent=1 // pred_check_branch
      %10 = sbr.rel (0) target = $region5
    $region4: #{layerwise_mlp_block.1} parent=1 // pred_region
      _
    $region5: #{layerwise_mlp_block.1} parent=1 // pred_fallthru
      _
    // Predicated region
    $region6: #{layerwise_mlp_block.1} parent=1 // pred_check
      _
    $region7: #{layerwise_mlp_block.1} parent=1 // pred_check_branch
      %12 = sbr.rel (0) target = $region9
    $region8: #{layerwise_mlp_block.1} parent=1 // pred_region
      _
    $region9: #{layerwise_mlp_block.1} parent=1 // pred_fallthru
      _
    // Predicated region
    $region10: #{layerwise_mlp_block.1} parent=1 // pred_check
      _
    $region11: #{layerwise_mlp_block.1} parent=1 // pred_check_branch
      %14 = sbr.rel (0) target = $region13
    $region12: #{layerwise_mlp_block.1} parent=1 // pred_region
      _
    $region13: #{layerwise_mlp_block.1} parent=1 // pred_fallthru
      _
    %p15 = scmp.eq.s32.totalorder 0, 0
    // Predicated region
    $region14: #{layerwise_mlp_block.1} parent=1 // pred_check
      %p16 = pneg %p15
    $region15: #{layerwise_mlp_block.1} parent=1 // pred_check_branch
      %18 = sbr.rel (%p16) target = $region17
    $region16: #{layerwise_mlp_block.1} parent=1 // pred_region
      %19 = vst [vmem:[#allocation2] sm:$0xff] 0.0
      %20 = vst [vmem:[#allocation2 + $0x8] sm:$0xff] 0.0
    $region17: #{layerwise_mlp_block.1} parent=1 // pred_fallthru
      _
    %v21 = vld [vmem:[#allocation2] sm:$0xff]
    %v22 = vld [vmem:[#allocation2 + $0x8] sm:$0xff]
    %v23 = vld [vmem:[%s0] sm:$0xff]
    %v24 = vld [vmem:[%s1] sm:$0xff]
    %v25 = vld [vmem:[%s1 + $0x8] sm:$0xff]
    %v26 = vld [vmem:[%s1 + $0x10] sm:$0xff]
    %v27 = vld [vmem:[%s1 + $0x18] sm:$0xff]
    %v28 = vld [vmem:[%s1 + $0x20] sm:$0xff]
    %v29 = vld [vmem:[%s1 + $0x28] sm:$0xff]
    %v30 = vld [vmem:[%s1 + $0x30] sm:$0xff]
    %v31 = vld [vmem:[%s1 + $0x38] sm:$0xff]
    %v32 = vld [vmem:[%s1 + $0x40] sm:$0xff]
    %v33 = vld [vmem:[%s1 + $0x48] sm:$0xff]
    %v34 = vld [vmem:[%s1 + $0x50] sm:$0xff]
    %v35 = vld [vmem:[%s1 + $0x58] sm:$0xff]
    %v36 = vld [vmem:[%s1 + $0x60] sm:$0xff]
    %v37 = vld [vmem:[%s1 + $0x68] sm:$0xff]
    %v38 = vld [vmem:[%s1 + $0x70] sm:$0xff]
    %v39 = vld [vmem:[%s1 + $0x78] sm:$0xff]
    %v40 = vld [vmem:[%s1 + $0x80] sm:$0xff]
    %v41 = vld [vmem:[%s1 + $0x88] sm:$0xff]
    %v42 = vld [vmem:[%s1 + $0x90] sm:$0xff]
    %v43 = vld [vmem:[%s1 + $0x98] sm:$0xff]
    %v44 = vld [vmem:[%s1 + $0xa0] sm:$0xff]
    %v45 = vld [vmem:[%s1 + $0xa8] sm:$0xff]
    %v46 = vld [vmem:[%s1 + $0xb0] sm:$0xff]
    %v47 = vld [vmem:[%s1 + $0xb8] sm:$0xff]
    %v48 = vld [vmem:[%s1 + $0xc0] sm:$0xff]
    %v49 = vld [vmem:[%s1 + $0xc8] sm:$0xff]
    %v50 = vld [vmem:[%s1 + $0xd0] sm:$0xff]
    %v51 = vld [vmem:[%s1 + $0xd8] sm:$0xff]
    %v52 = vld [vmem:[%s1 + $0xe0] sm:$0xff]
    %v53 = vld [vmem:[%s1 + $0xe8] sm:$0xff]
    %v54 = vld [vmem:[%s1 + $0xf0] sm:$0xff]
    %v55 = vld [vmem:[%s1 + $0xf8] sm:$0xff]
    %v57 = vunpack.c.l.b16 %v23
    %v58 = vunpack.c.h.b16 %v23
    %v59 = vpack.c.b16 %v57, %v57
    %v60 = vpack.c.b16 %v58, %v58
    %v95 = vunpack.c.l.b16 %v24
    %v96 = vunpack.c.h.b16 %v24
    %v97 = vunpack.c.l.b16 %v25
    %v98 = vunpack.c.h.b16 %v25
    %v99 = vunpack.c.l.b16 %v26
    %v100 = vunpack.c.h.b16 %v26
    %v101 = vunpack.c.l.b16 %v27
    %v102 = vunpack.c.h.b16 %v27
    %v103 = vunpack.c.l.b16 %v28
    %v104 = vunpack.c.h.b16 %v28
    %v105 = vunpack.c.l.b16 %v29
    %v106 = vunpack.c.h.b16 %v29
    %v107 = vunpack.c.l.b16 %v30
    %v108 = vunpack.c.h.b16 %v30
    %v109 = vunpack.c.l.b16 %v31
    %v110 = vunpack.c.h.b16 %v31
    %v111 = vunpack.c.l.b16 %v32
    %v112 = vunpack.c.h.b16 %v32
    %v113 = vunpack.c.l.b16 %v33
    %v114 = vunpack.c.h.b16 %v33
    %v115 = vunpack.c.l.b16 %v34
    %v116 = vunpack.c.h.b16 %v34
    %v117 = vunpack.c.l.b16 %v35
    %v118 = vunpack.c.h.b16 %v35
    %v119 = vunpack.c.l.b16 %v36
    %v120 = vunpack.c.h.b16 %v36
    %v121 = vunpack.c.l.b16 %v37
    %v122 = vunpack.c.h.b16 %v37
    %v123 = vunpack.c.l.b16 %v38
    %v124 = vunpack.c.h.b16 %v38
    %v125 = vunpack.c.l.b16 %v39
    %v126 = vunpack.c.h.b16 %v39
    %v127 = vunpack.c.l.b16 %v40
    %v128 = vunpack.c.h.b16 %v40
    %v129 = vunpack.c.l.b16 %v41
    %v130 = vunpack.c.h.b16 %v41
    %v131 = vunpack.c.l.b16 %v42
    %v132 = vunpack.c.h.b16 %v42
    %v133 = vunpack.c.l.b16 %v43
    %v134 = vunpack.c.h.b16 %v43
    %v135 = vunpack.c.l.b16 %v44
    %v136 = vunpack.c.h.b16 %v44
    %v137 = vunpack.c.l.b16 %v45
    %v138 = vunpack.c.h.b16 %v45
    %v139 = vunpack.c.l.b16 %v46
    %v140 = vunpack.c.h.b16 %v46
    %v141 = vunpack.c.l.b16 %v47
    %v142 = vunpack.c.h.b16 %v47
    %v143 = vunpack.c.l.b16 %v48
    %v144 = vunpack.c.h.b16 %v48
    %v145 = vunpack.c.l.b16 %v49
    %v146 = vunpack.c.h.b16 %v49
    %v147 = vunpack.c.l.b16 %v50
    %v148 = vunpack.c.h.b16 %v50
    %v149 = vunpack.c.l.b16 %v51
    %v150 = vunpack.c.h.b16 %v51
    %v151 = vunpack.c.l.b16 %v52
    %v152 = vunpack.c.h.b16 %v52
    %v153 = vunpack.c.l.b16 %v53
    %v154 = vunpack.c.h.b16 %v53
    %v155 = vunpack.c.l.b16 %v54
    %v156 = vunpack.c.h.b16 %v54
    %v157 = vunpack.c.l.b16 %v55
    %v158 = vunpack.c.h.b16 %v55
    %v159 = vpack.c.b16 %v97, %v95
    %v160 = vpack.c.b16 %v98, %v96
    %v161 = vpack.c.b16 %v101, %v99
    %v162 = vpack.c.b16 %v102, %v100
    %v163 = vpack.c.b16 %v105, %v103
    %v164 = vpack.c.b16 %v106, %v104
    %v165 = vpack.c.b16 %v109, %v107
    %v166 = vpack.c.b16 %v110, %v108
    %v167 = vpack.c.b16 %v113, %v111
    %v168 = vpack.c.b16 %v114, %v112
    %v169 = vpack.c.b16 %v117, %v115
    %v170 = vpack.c.b16 %v118, %v116
    %v171 = vpack.c.b16 %v121, %v119
    %v172 = vpack.c.b16 %v122, %v120
    %v173 = vpack.c.b16 %v125, %v123
    %v174 = vpack.c.b16 %v126, %v124
    %v175 = vpack.c.b16 %v129, %v127
    %v176 = vpack.c.b16 %v130, %v128
    %v177 = vpack.c.b16 %v133, %v131
    %v178 = vpack.c.b16 %v134, %v132
    %v179 = vpack.c.b16 %v137, %v135
    %v180 = vpack.c.b16 %v138, %v136
    %v181 = vpack.c.b16 %v141, %v139
    %v182 = vpack.c.b16 %v142, %v140
    %v183 = vpack.c.b16 %v145, %v143
    %v184 = vpack.c.b16 %v146, %v144
    %v185 = vpack.c.b16 %v149, %v147
    %v186 = vpack.c.b16 %v150, %v148
    %v187 = vpack.c.b16 %v153, %v151
    %v188 = vpack.c.b16 %v154, %v152
    %v189 = vpack.c.b16 %v157, %v155
    %v190 = vpack.c.b16 %v158, %v156
    %223 = vmatprep.subr.bf16.mxu0 %v174
    %224 = vmatpush1.bf16.xpose.msra.mxu0 %v173
    %225 = vmatprep.subr.bf16.mxu0 %v172
    %226 = vmatpush1.bf16.xpose.msra.mxu0 %v171
    %227 = vmatprep.subr.bf16.mxu0 %v170
    %228 = vmatpush1.bf16.xpose.msra.mxu0 %v169
    %229 = vmatprep.subr.bf16.mxu0 %v168
    %230 = vmatpush1.bf16.xpose.msra.mxu0 %v167
    %231 = vmatprep.subr.bf16.mxu0 %v166
    %232 = vmatpush1.bf16.xpose.msra.mxu0 %v165
    %233 = vmatprep.subr.bf16.mxu0 %v164
    %234 = vmatpush1.bf16.xpose.msra.mxu0 %v163
    %235 = vmatprep.subr.bf16.mxu0 %v162
    %236 = vmatpush1.bf16.xpose.msra.mxu0 %v161
    %237 = vmatprep.subr.bf16.mxu0 %v160
    %238 = vmatpush1.bf16.xpose.msra.mxu0 %v159
    %239 = vmatprep.subr.bf16.mxu0 %v190
    %240 = vmatpush2.bf16.xpose.msra.mxu0 %v189
    %241 = vmatprep.subr.bf16.mxu0 %v188
    %242 = vmatpush2.bf16.xpose.msra.mxu0 %v187
    %243 = vmatprep.subr.bf16.mxu0 %v186
    %244 = vmatpush2.bf16.xpose.msra.mxu0 %v185
    %245 = vmatprep.subr.bf16.mxu0 %v184
    %246 = vmatpush2.bf16.xpose.msra.mxu0 %v183
    %247 = vmatprep.subr.bf16.mxu0 %v182
    %248 = vmatpush2.bf16.xpose.msra.mxu0 %v181
    %249 = vmatprep.subr.bf16.mxu0 %v180
    %250 = vmatpush2.bf16.xpose.msra.mxu0 %v179
    %251 = vmatprep.subr.bf16.mxu0 %v178
    %252 = vmatpush2.bf16.xpose.msra.mxu0 %v177
    %253 = vmatprep.subr.bf16.mxu0 %v176
    %254 = vmatpush2.bf16.xpose.msra.mxu0 %v175
    %255 = vmatprep.mubr.bf16.mxu0 %v60
    %256 = vmatmul.mubr.bf16.gmra.mxu0 %v59
    %v257 = vpop.f32.mrf.mxu0
    %v258 = vadd.f32 0.0, %v257
    %v259 = vpop.f32.mrf.mxu0
    %v260 = vadd.f32 0.0, %v259
    %v261 = vpop.f32.mrf.mxu0
    %v262 = vpop.f32.mrf.mxu0
    %263 = vdwg.mxu0
    %v264 = vadd.f32 %v21, %v258
    %v265 = vadd.f32 %v22, %v260
    %266 = vst [vmem:[#allocation2] sm:$0xff] %v264
    %267 = vst [vmem:[#allocation2 + $0x8] sm:$0xff] %v265
    // Predicated region
    $region18: #{layerwise_mlp_block.1} parent=1 // pred_check
      %p268 = pneg %p15
    $region19: #{layerwise_mlp_block.1} parent=1 // pred_check_branch
      %270 = sbr.rel (%p268) target = $region21
    $region20: #{layerwise_mlp_block.1} parent=1 // pred_region
      %v271 = vld [vmem:[#allocation2] sm:$0xff]
      %v272 = vld [vmem:[#allocation2 + $0x8] sm:$0xff]
      %v273 = vld [vmem:[%s2] sm:$0x3]
      %v275 = vlaneseq
      %v276 = vshrl.u32 %v275, 7
      %v277 = vsub.s32 0, %v276
      %v278 = vrot.slane %v273, %v277
      %v279 = vlaneseq
      %v280 = vshrl.u32 %v279, 7
      %v281 = vsub.s32 1, %v280
      %v282 = vrot.slane %v273, %v281
      %v285 = vadd.f32 %v271, %v278
      %v286 = vadd.f32 %v272, %v282
      %v287 = vmax.f32 %v285, 0.0
      %v288 = vmax.f32 %v286, 0.0
      %289 = vst [vmem:[#allocation3] sm:$0xff] %v287
      %290 = vst [vmem:[#allocation3 + $0x8] sm:$0xff] %v288
    $region21: #{layerwise_mlp_block.1} parent=1 // pred_fallthru
      _
    // Predicated region
    $region22: #{layerwise_mlp_block.1} parent=1 // pred_check
      _
    $region23: #{layerwise_mlp_block.1} parent=1 // pred_check_branch
      %292 = sbr.rel (0) target = $region25
    $region24: #{layerwise_mlp_block.1} parent=1 // pred_region
      %s294 = ssub.s32 256, 256
      %295 = vsyncadd [#allocation4], %s294
      %s297 = sshll.u32 [#allocation3], 4
      %s298 = int_to_ptr.vmem [resolvable:$true] %s297
      %300 = dma.vmem_to_hbm [thread:$0]  %s298, 256, %s3, [#allocation4]
    $region25: #{layerwise_mlp_block.1} parent=1 // pred_fallthru
      _
    // Predicated region
    $region26: #{layerwise_mlp_block.1} parent=1 // pred_check
      _
    $region27: #{layerwise_mlp_block.1} parent=1 // pred_check_branch
      %302 = sbr.rel (0) target = $region29
    $region28: #{layerwise_mlp_block.1} parent=1 // pred_region
      %303 = dma.done [#allocation4], 256
    $region29: #{layerwise_mlp_block.1} parent=1 // pred_fallthru
      _
    %304 = vsyncpa [#allocation4], 1

</llo_original>
